<compile_context>
chip_gen: v5e
topology: v5e:2x2
jax: 0.10.0
libtpu: 0.0.40
codegen_flags: <defaults>
</compile_context>

<pallas_src>
import functools
import math

import jax
import jax.numpy as jnp
from jax.experimental import pallas as pl
from jax.experimental.pallas import tpu as pltpu

HIDDEN = 25        # matches nn.Linear(..., 25) in the PyTorch module
OUT_PAD = 128      # lane-dense padded output width (also fits v5e's 128-wide MXU)


# --------------------------------------------------------------------------- #
# Kernel
# --------------------------------------------------------------------------- #
def _fused_heads_kernel(state_ref, action_ref,
                        w1s_ref, w1a_ref, b1_ref,
                        w2_ref, b2_ref,
                        w3_ref, b3_ref,
                        out_ref):
    """One grid step == one Q head.  3-layer MLP, final layer padded to OUT_PAD."""
    s = state_ref[...]
    a = action_ref[...]
    # Split first matmul == matmul on concat([state, action], 1) without the concat.
    h1 = (jnp.dot(s, w1s_ref[...], preferred_element_type=jnp.float32)
          + jnp.dot(a, w1a_ref[...], preferred_element_type=jnp.float32)
          + b1_ref[...])
    h1 = jnp.maximum(h1, 0.0)
    h2 = jnp.dot(h1, w2_ref[...], preferred_element_type=jnp.float32) + b2_ref[...]
    h2 = jnp.maximum(h2, 0.0)
    out = jnp.dot(h2, w3_ref[...], preferred_element_type=jnp.float32) + b3_ref[...]
    out_ref[...] = out.astype(out_ref.dtype)


def _fused_mlp3_heads(state, action, w1s, w1a, b1, w2, b2, w3, b3):
    """Run all stacked heads in a single gridded pallas_call.

    Shapes:
      state  [B, S]           action [B, A]
      w1s    [H, S, Hd]       w1a    [H, A, Hd]     b1 [H, 1, Hd]
      w2     [H, Hd, Hd]      b2     [H, 1, Hd]
      w3     [H, Hd, OUT_PAD] b3     [H, 1, OUT_PAD]
    Returns [H, B, OUT_PAD] (caller slices real columns per head).
    """
    num_heads, s_dim, hid = w1s.shape
    a_dim = w1a.shape[1]
    batch = state.shape[0]
    out_pad = w3.shape[2]

    flops = 2 * batch * num_heads * (s_dim * hid + a_dim * hid
                                     + hid * hid + hid * out_pad)
    bytes_accessed = sum(int(x.size) * 4 for x in
                         (state, action, w1s, w1a, b1, w2, b2, w3, b3))
    bytes_accessed += num_heads * batch * out_pad * 4  # output slab

    grid_spec = pltpu.PrefetchScalarGridSpec(
        num_scalar_prefetch=0,
        grid=(num_heads,),
        in_specs=[
            # state/action: same block every step -> DMA'd once, resident.
            pl.BlockSpec((batch, s_dim), lambda h: (0, 0)),
            pl.BlockSpec((batch, a_dim), lambda h: (0, 0)),
            # per-head parameter blocks (head dim squeezed away in the kernel)
            pl.BlockSpec((None, s_dim, hid), lambda h: (h, 0, 0)),
            pl.BlockSpec((None, a_dim, hid), lambda h: (h, 0, 0)),
            pl.BlockSpec((None, 1, hid), lambda h: (h, 0, 0)),
            pl.BlockSpec((None, hid, hid), lambda h: (h, 0, 0)),
            pl.BlockSpec((None, 1, hid), lambda h: (h, 0, 0)),
            pl.BlockSpec((None, hid, out_pad), lambda h: (h, 0, 0)),
            pl.BlockSpec((None, 1, out_pad), lambda h: (h, 0, 0)),
        ],
        out_specs=pl.BlockSpec((None, batch, out_pad), lambda h: (h, 0, 0)),
    )

    return pl.pallas_call(
        _fused_heads_kernel,
        out_shape=jax.ShapeDtypeStruct((num_heads, batch, out_pad), jnp.float32),
        grid_spec=grid_spec,
        compiler_params=pltpu.CompilerParams(
            dimension_semantics=("parallel",)),   # shard heads across TCs on v7x
        cost_estimate=pl.CostEstimate(
            flops=flops, transcendentals=0, bytes_accessed=bytes_accessed),
    )(state, action, w1s, w1a, b1, w2, b2, w3, b3)


# --------------------------------------------------------------------------- #
# Parameter init (stacked-head layout) and forward wrappers
# --------------------------------------------------------------------------- #
def _init_linear(key, in_dim, out_dim, out_pad=None):
    """PyTorch-style uniform(-1/sqrt(in), 1/sqrt(in)); W stored [in, out].

    If out_pad is given, W/b are zero-padded along the output dim to out_pad so
    the kernel's final store is lane-dense."""
    kw, kb = jax.random.split(key)
    bound = 1.0 / math.sqrt(in_dim)
    w = jax.random.uniform(kw, (in_dim, out_dim), jnp.float32, -bound, bound)
    b = jax.random.uniform(kb, (1, out_dim), jnp.float32, -bound, bound)
    if out_pad is not None and out_pad > out_dim:
        w = jnp.pad(w, ((0, 0), (0, out_pad - out_dim)))
        b = jnp.pad(b, ((0, 0), (0, out_pad - out_dim)))
    return w, b


def init_critic_params(key, state_dim, action_dim, discrete_ranges, hidden=HIDDEN):
    """Heads are stacked in order: [q1, q2, *discrete_ranges.keys()]."""
    sa_dim = state_dim + action_dim
    head_out_dims = [1, 1] + [int(n) for n in discrete_ranges.values()]
    num_heads = len(head_out_dims)

    keys = jax.random.split(key, 3 * num_heads)
    w1_list, b1_list, w2_list, b2_list, w3_list, b3_list = [], [], [], [], [], []
    for h, out_dim in enumerate(head_out_dims):
        w1, b1 = _init_linear(keys[3 * h + 0], sa_dim, hidden)
        w2, b2 = _init_linear(keys[3 * h + 1], hidden, hidden)
        w3, b3 = _init_linear(keys[3 * h + 2], hidden, out_dim, out_pad=OUT_PAD)
        w1_list.append(w1); b1_list.append(b1)
        w2_list.append(w2); b2_list.append(b2)
        w3_list.append(w3); b3_list.append(b3)

    w1_full = jnp.stack(w1_list)                 # [H, sa_dim, hidden]
    params = {
        "w1s": w1_full[:, :state_dim, :],        # [H, S, hidden]
        "w1a": w1_full[:, state_dim:, :],        # [H, A, hidden]
        "b1": jnp.stack(b1_list),                # [H, 1, hidden]
        "w2": jnp.stack(w2_list),                # [H, hidden, hidden]
        "b2": jnp.stack(b2_list),                # [H, 1, hidden]
        "w3": jnp.stack(w3_list),                # [H, hidden, OUT_PAD]
        "b3": jnp.stack(b3_list),                # [H, 1, OUT_PAD]
    }
    return params


def _run_heads(params, state, action):
    return _fused_mlp3_heads(
        state, action,
        params["w1s"], params["w1a"], params["b1"],
        params["w2"], params["b2"],
        params["w3"], params["b3"])


def critic_forward(params, discrete_ranges, state, continuous_action):
    """Mirror of Critic.forward: returns (q1_cont, q2_cont, discrete_q_values)."""
    out = _run_heads(params, state, continuous_action)   # [H, B, OUT_PAD]
    q1_cont = out[0, :, :1]
    q2_cont = out[1, :, :1]
    discrete_q_values = {}
    for i, (name, num_actions) in enumerate(discrete_ranges.items()):
        discrete_q_values[name] = out[2 + i, :, :num_actions]
    return q1_cont, q2_cont, discrete_q_values


def critic_q1(params, state, action):
    """Mirror of Critic.Q1: only head 0 (l1/l2/l3)."""
    head0 = {k: v[0:1] for k, v in params.items()}
    out = _fused_mlp3_heads(
        state, action,
        head0["w1s"], head0["w1a"], head0["b1"],
        head0["w2"], head0["b2"],
        head0["w3"], head0["b3"])
    return out[0, :, :1]


# --------------------------------------------------------------------------- #
# Demo / sanity check
# --------------------------------------------------------------------------- #
if __name__ == "__main__":
    batch = 2
    state_dim = 8
    action_dim = 4
    discrete_ranges = {"move": 3, "turn": 5}

    key = jax.random.PRNGKey(0)
    kp, ks, ka = jax.random.split(key, 3)

    params = init_critic_params(kp, state_dim, action_dim, discrete_ranges)
    state = jax.random.normal(ks, (batch, state_dim), jnp.float32)
    continuous_action = jax.random.normal(ka, (batch, action_dim), jnp.float32)

    q1, q2, dq = critic_forward(params, discrete_ranges, state, continuous_action)
    q1 = jax.block_until_ready(q1)
    q2 = jax.block_until_ready(q2)
    dq = {name: jax.block_until_ready(v) for name, v in dq.items()}
    q1_only = jax.block_until_ready(critic_q1(params, state, continuous_action))

    # Pure-JAX reference of the same math (per head).
    def _ref_head(h, out_dim):
        sa = jnp.concatenate([state, continuous_action], axis=1)
        w1 = jnp.concatenate([params["w1s"][h], params["w1a"][h]], axis=0)
        x = jnp.maximum(sa @ w1 + params["b1"][h], 0.0)
        x = jnp.maximum(x @ params["w2"][h] + params["b2"][h], 0.0)
        return x @ params["w3"][h, :, :out_dim] + params["b3"][h, :, :out_dim]

    assert q1.shape == (batch, 1) and q2.shape == (batch, 1)
    assert dq["move"].shape == (batch, 3) and dq["turn"].shape == (batch, 5)
    assert jnp.allclose(q1, _ref_head(0, 1), atol=1e-5), "q1 mismatch vs reference"
    assert jnp.allclose(q2, _ref_head(1, 1), atol=1e-5), "q2 mismatch vs reference"
    assert jnp.allclose(dq["move"], _ref_head(2, 3), atol=1e-5), "move head mismatch"
    assert jnp.allclose(dq["turn"], _ref_head(3, 5), atol=1e-5), "turn head mismatch"
    assert jnp.allclose(q1_only, q1, atol=1e-5), "Q1 path mismatch"

    print("KERNEL_OK")
</pallas_src>

<mosaic_0001>
module attributes {stable_mosaic.version = 11 : i64} {
  func.func @_fused_heads_kernel(%arg0: i32, %arg1: memref<2x8xf32, #tpu.memory_space<vmem>>, %arg2: memref<2x4xf32, #tpu.memory_space<vmem>>, %arg3: memref<1x8x25xf32, #tpu.memory_space<vmem>>, %arg4: memref<1x4x25xf32, #tpu.memory_space<vmem>>, %arg5: memref<1x1x25xf32, #tpu.memory_space<vmem>>, %arg6: memref<1x25x25xf32, #tpu.memory_space<vmem>>, %arg7: memref<1x1x25xf32, #tpu.memory_space<vmem>>, %arg8: memref<1x25x128xf32, #tpu.memory_space<vmem>>, %arg9: memref<1x1x128xf32, #tpu.memory_space<vmem>>, %arg10: memref<1x2x128xf32, #tpu.memory_space<vmem>>) attributes {dimension_semantics = [#tpu.dimension_semantics<parallel>], iteration_bounds = array<i64: 4>, scalar_prefetch = 0 : i64, scratch_operands = 0 : i64, tpu.core_type = #tpu.core_type<tc>, window_params = [{pipeline_mode = #tpu.pipeline_mode<synchronous>, transform_indices = @transform_0, window_bounds = array<i64: 2, 8>}, {pipeline_mode = #tpu.pipeline_mode<synchronous>, transform_indices = @transform_1, window_bounds = array<i64: 2, 4>}, {transform_indices = @transform_2, window_bounds = array<i64: 1, 8, 25>}, {transform_indices = @transform_3, window_bounds = array<i64: 1, 4, 25>}, {transform_indices = @transform_4, window_bounds = array<i64: 1, 1, 25>}, {transform_indices = @transform_5, window_bounds = array<i64: 1, 25, 25>}, {transform_indices = @transform_6, window_bounds = array<i64: 1, 1, 25>}, {transform_indices = @transform_7, window_bounds = array<i64: 1, 25, 128>}, {transform_indices = @transform_8, window_bounds = array<i64: 1, 1, 128>}, {transform_indices = @transform_9, window_bounds = array<i64: 1, 2, 128>}]} {
    %c0 = arith.constant 0 : index
    %c0_0 = arith.constant 0 : index
    %0 = vector.load %arg1[%c0, %c0_0] : memref<2x8xf32, #tpu.memory_space<vmem>>, vector<2x8xf32>
    %c0_1 = arith.constant 0 : index
    %c0_2 = arith.constant 0 : index
    %1 = vector.load %arg2[%c0_1, %c0_2] : memref<2x4xf32, #tpu.memory_space<vmem>>, vector<2x4xf32>
    %c0_3 = arith.constant 0 : index
    %c0_4 = arith.constant 0 : index
    %c0_5 = arith.constant 0 : index
    %2 = vector.load %arg3[%c0_3, %c0_4, %c0_5] : memref<1x8x25xf32, #tpu.memory_space<vmem>>, vector<1x8x25xf32>
    %3 = vector.shape_cast %2 : vector<1x8x25xf32> to vector<8x25xf32>
    %cst = arith.constant dense<0.000000e+00> : vector<2x25xf32>
    %4 = tpu.matmul %0, %3, %cst {dimension_numbers = #tpu.dot_dimension_numbers<[1], [0], [0], [1], [0, 0, 1, 1], [], []>} : vector<2x8xf32>, vector<8x25xf32>, vector<2x25xf32> -> vector<2x25xf32>
    %c0_6 = arith.constant 0 : index
    %c0_7 = arith.constant 0 : index
    %c0_8 = arith.constant 0 : index
    %5 = vector.load %arg4[%c0_6, %c0_7, %c0_8] : memref<1x4x25xf32, #tpu.memory_space<vmem>>, vector<1x4x25xf32>
    %6 = vector.shape_cast %5 : vector<1x4x25xf32> to vector<4x25xf32>
    %cst_9 = arith.constant dense<0.000000e+00> : vector<2x25xf32>
    %7 = tpu.matmul %1, %6, %cst_9 {dimension_numbers = #tpu.dot_dimension_numbers<[1], [0], [0], [1], [0, 0, 1, 1], [], []>} : vector<2x4xf32>, vector<4x25xf32>, vector<2x25xf32> -> vector<2x25xf32>
    %8 = arith.addf %4, %7 : vector<2x25xf32>
    %c0_10 = arith.constant 0 : index
    %c0_11 = arith.constant 0 : index
    %c0_12 = arith.constant 0 : index
    %9 = vector.load %arg5[%c0_10, %c0_11, %c0_12] : memref<1x1x25xf32, #tpu.memory_space<vmem>>, vector<1x1x25xf32>
    %10 = vector.shape_cast %9 : vector<1x1x25xf32> to vector<1x25xf32>
    %11 = vector.broadcast %10 : vector<1x25xf32> to vector<2x25xf32>
    %12 = arith.addf %8, %11 : vector<2x25xf32>
    %cst_13 = arith.constant 0.000000e+00 : f32
    %13 = vector.broadcast %cst_13 : f32 to vector<2x25xf32>
    %14 = arith.maximumf %12, %13 : vector<2x25xf32>
    %c0_14 = arith.constant 0 : index
    %c0_15 = arith.constant 0 : index
    %c0_16 = arith.constant 0 : index
    %15 = vector.load %arg6[%c0_14, %c0_15, %c0_16] : memref<1x25x25xf32, #tpu.memory_space<vmem>>, vector<1x25x25xf32>
    %16 = vector.shape_cast %15 : vector<1x25x25xf32> to vector<25x25xf32>
    %cst_17 = arith.constant dense<0.000000e+00> : vector<2x25xf32>
    %17 = tpu.matmul %14, %16, %cst_17 {dimension_numbers = #tpu.dot_dimension_numbers<[1], [0], [0], [1], [0, 0, 1, 1], [], []>} : vector<2x25xf32>, vector<25x25xf32>, vector<2x25xf32> -> vector<2x25xf32>
    %c0_18 = arith.constant 0 : index
    %c0_19 = arith.constant 0 : index
    %c0_20 = arith.constant 0 : index
    %18 = vector.load %arg7[%c0_18, %c0_19, %c0_20] : memref<1x1x25xf32, #tpu.memory_space<vmem>>, vector<1x1x25xf32>
    %19 = vector.shape_cast %18 : vector<1x1x25xf32> to vector<1x25xf32>
    %20 = vector.broadcast %19 : vector<1x25xf32> to vector<2x25xf32>
    %21 = arith.addf %17, %20 : vector<2x25xf32>
    %cst_21 = arith.constant 0.000000e+00 : f32
    %22 = vector.broadcast %cst_21 : f32 to vector<2x25xf32>
    %23 = arith.maximumf %21, %22 : vector<2x25xf32>
    %c0_22 = arith.constant 0 : index
    %c0_23 = arith.constant 0 : index
    %c0_24 = arith.constant 0 : index
    %24 = vector.load %arg8[%c0_22, %c0_23, %c0_24] : memref<1x25x128xf32, #tpu.memory_space<vmem>>, vector<1x25x128xf32>
    %25 = vector.shape_cast %24 : vector<1x25x128xf32> to vector<25x128xf32>
    %cst_25 = arith.constant dense<0.000000e+00> : vector<2x128xf32>
    %26 = tpu.matmul %23, %25, %cst_25 {dimension_numbers = #tpu.dot_dimension_numbers<[1], [0], [0], [1], [0, 0, 1, 1], [], []>} : vector<2x25xf32>, vector<25x128xf32>, vector<2x128xf32> -> vector<2x128xf32>
    %c0_26 = arith.constant 0 : index
    %c0_27 = arith.constant 0 : index
    %c0_28 = arith.constant 0 : index
    %27 = vector.load %arg9[%c0_26, %c0_27, %c0_28] : memref<1x1x128xf32, #tpu.memory_space<vmem>>, vector<1x1x128xf32>
    %28 = vector.shape_cast %27 : vector<1x1x128xf32> to vector<1x128xf32>
    %29 = vector.broadcast %28 : vector<1x128xf32> to vector<2x128xf32>
    %30 = arith.addf %26, %29 : vector<2x128xf32>
    %c0_29 = arith.constant 0 : index
    %c0_30 = arith.constant 0 : index
    %c0_31 = arith.constant 0 : index
    %31 = vector.load %arg10[%c0_29, %c0_30, %c0_31] : memref<1x2x128xf32, #tpu.memory_space<vmem>>, vector<1x2x128xf32>
    %32 = vector.shape_cast %31 : vector<1x2x128xf32> to vector<2x128xf32>
    %33 = vector.shape_cast %30 : vector<2x128xf32> to vector<1x2x128xf32>
    tpu.vector_store %arg10[%c0_29, %c0_30, %c0_31], %33 {strides = array<i32>} : memref<1x2x128xf32, #tpu.memory_space<vmem>>, vector<1x2x128xf32>,
    return
  }
  func.func @transform_0(%arg0: i32) -> (i32, i32) {
    %c0_i32 = arith.constant 0 : i32
    %c0_i32_0 = arith.constant 0 : i32
    %c0_i32_1 = arith.constant 0 : i32
    return %c0_i32, %c0_i32_0 : i32, i32
  }
  func.func @transform_1(%arg0: i32) -> (i32, i32) {
    %c0_i32 = arith.constant 0 : i32
    %c0_i32_0 = arith.constant 0 : i32
    %c0_i32_1 = arith.constant 0 : i32
    return %c0_i32, %c0_i32_0 : i32, i32
  }
  func.func @transform_2(%arg0: i32) -> (i32, i32, i32) {
    %c0_i32 = arith.constant 0 : i32
    %c0_i32_0 = arith.constant 0 : i32
    %c0_i32_1 = arith.constant 0 : i32
    return %arg0, %c0_i32, %c0_i32_0 : i32, i32, i32
  }
  func.func @transform_3(%arg0: i32) -> (i32, i32, i32) {
    %c0_i32 = arith.constant 0 : i32
    %c0_i32_0 = arith.constant 0 : i32
    %c0_i32_1 = arith.constant 0 : i32
    return %arg0, %c0_i32, %c0_i32_0 : i32, i32, i32
  }
  func.func @transform_4(%arg0: i32) -> (i32, i32, i32) {
    %c0_i32 = arith.constant 0 : i32
    %c0_i32_0 = arith.constant 0 : i32
    %c0_i32_1 = arith.constant 0 : i32
    return %arg0, %c0_i32, %c0_i32_0 : i32, i32, i32
  }
  func.func @transform_5(%arg0: i32) -> (i32, i32, i32) {
    %c0_i32 = arith.constant 0 : i32
    %c0_i32_0 = arith.constant 0 : i32
    %c0_i32_1 = arith.constant 0 : i32
    return %arg0, %c0_i32, %c0_i32_0 : i32, i32, i32
  }
  func.func @transform_6(%arg0: i32) -> (i32, i32, i32) {
    %c0_i32 = arith.constant 0 : i32
    %c0_i32_0 = arith.constant 0 : i32
    %c0_i32_1 = arith.constant 0 : i32
    return %arg0, %c0_i32, %c0_i32_0 : i32, i32, i32
  }
  func.func @transform_7(%arg0: i32) -> (i32, i32, i32) {
    %c0_i32 = arith.constant 0 : i32
    %c0_i32_0 = arith.constant 0 : i32
    %c0_i32_1 = arith.constant 0 : i32
    return %arg0, %c0_i32, %c0_i32_0 : i32, i32, i32
  }
  func.func @transform_8(%arg0: i32) -> (i32, i32, i32) {
    %c0_i32 = arith.constant 0 : i32
    %c0_i32_0 = arith.constant 0 : i32
    %c0_i32_1 = arith.constant 0 : i32
    return %arg0, %c0_i32, %c0_i32_0 : i32, i32, i32
  }
  func.func @transform_9(%arg0: i32) -> (i32, i32, i32) {
    %c0_i32 = arith.constant 0 : i32
    %c0_i32_0 = arith.constant 0 : i32
    %c0_i32_1 = arith.constant 0 : i32
    return %arg0, %c0_i32, %c0_i32_0 : i32, i32, i32
  }
}

</mosaic_0001>

<llo_original>
// kernel: tpu_custom_call.1
$region0: #{tpu_custom_call.1}
  #allocation0 [shape = 'u32[]', space=smem, size = 0x4, offset = 0x4, fixed_abs, tag = 'smem constant byte address 0x4 - core index']
  #allocation1 [shape = 'u32[72,128]{1,0:T(1,128)}', space=vmem, size = 0x9000, scoped, tag = 'internal scratch']
  %s0 = inlined_call_operand.vmem [shape: f32[2,8], index: 0, kind: input, shape index: {}]
  %s1 = inlined_call_operand.vmem [shape: f32[2,4], index: 1, kind: input, shape index: {}]
  %s2 = inlined_call_operand.vmem [shape: f32[4,8,25], index: 2, kind: input, shape index: {}]
  %s3 = inlined_call_operand.vmem [shape: f32[4,4,25], index: 3, kind: input, shape index: {}]
  %s4 = inlined_call_operand.vmem [shape: f32[4,1,25], index: 4, kind: input, shape index: {}]
  %s5 = inlined_call_operand.vmem [shape: f32[4,25,25], index: 5, kind: input, shape index: {}]
  %s6 = inlined_call_operand.vmem [shape: f32[4,1,25], index: 6, kind: input, shape index: {}]
  %s7 = inlined_call_operand.vmem [shape: f32[4,25,128], index: 7, kind: input, shape index: {}]
  %s8 = inlined_call_operand.vmem [shape: f32[4,1,128], index: 8, kind: input, shape index: {}]
  %s9 = inlined_call_operand.hbm [shape: f32[4,2,128], index: 9, kind: output, shape index: {}]
  %s10 = sld [smem:[#allocation0]]
  $region69: #{tpu_custom_call.1} parent=0
    _
  %s12 = ssub.s32 1, %s10
  %s13 = scalar_select 0, %s12, %s10
  $region1: #{tpu_custom_call.1} parent=0
    #allocation2 [shape = 'u8[2048]{0}', space=vmem, size = 0x800, scoped, tag = 'output window, operand 0']
    #allocation3 [shape = 's32[2]{0}', space=sflag, size = 0x8, scoped, tag = 'scoped memory for tpu_custom_call.1']
    %14 = vsyncpa [#allocation3], 0
    %s15 = scalar_lea.sflag [#allocation3], 1
    %16 = vsyncpa %s15, 0
    loop: start=0, step=1, limit=6
    $region2: #{tpu_custom_call.1} parent=1 // loop_pre_header
      _
    $region3: #{tpu_custom_call.1} parent=1 // loop_header
      %s18 = sphi 0, %s22
      %p19 = scmp.ge.s32.totalorder %s18, 6
      %s26 = sphi 0, %s26
      %s28 = sphi 0, %s26
      %s29 = sphi 0, %s28
      %s43 = sphi 0, %s29
      %s47 = sphi 0, %s47
      %s49 = sphi 0, %s47
      %s50 = sphi 0, %s49
      %s64 = sphi 0, %s50
      %s70 = sphi 0, %s72
      %s73 = sphi 0, %s70
      %s74 = sphi 0, %s73
      %s90 = sphi 0, %s74
      %s96 = sphi 0, %s98
      %s99 = sphi 0, %s96
      %s100 = sphi 0, %s99
      %s116 = sphi 0, %s100
      %s122 = sphi 0, %s124
      %s125 = sphi 0, %s122
      %s126 = sphi 0, %s125
      %s142 = sphi 0, %s126
      %s148 = sphi 0, %s150
      %s151 = sphi 0, %s148
      %s152 = sphi 0, %s151
      %s168 = sphi 0, %s152
      %s174 = sphi 0, %s176
      %s177 = sphi 0, %s174
      %s178 = sphi 0, %s177
      %s194 = sphi 0, %s178
      %s200 = sphi 0, %s202
      %s203 = sphi 0, %s200
      %s204 = sphi 0, %s203
      %s220 = sphi 0, %s204
      %s226 = sphi 0, %s228
      %s229 = sphi 0, %s226
      %s230 = sphi 0, %s229
      %s246 = sphi 0, %s230
      %s252 = sphi 0, %s254
      %s255 = sphi 0, %s252
      %s256 = sphi 0, %s255
      %s272 = sphi 0, %s256
    $region4: #{tpu_custom_call.1} parent=1 // loop_header_branch
      %21 = sbr.rel (%p19) target = $region8
    $region5: #{tpu_custom_call.1} parent=1 // loop_body
      %s23 = ssub.s32 %s18, 1
      %s24 = ssub.s32 %s18, 2
      %s25 = sadd.s32 %s18, 1
      %s27 = sadd.s32 %s26, 1
      %p30 = scmp.eq.s32.totalorder %s18, 3
      %p31 = scmp.ne.s32.totalorder %s26, %s28
      %p32 = scmp.eq.s32.totalorder %s18, 0
      %p33 = por %p31, %p32
      %p34 = scmp.ne.s32.totalorder %s26, %s28
      %p35 = scmp.eq.s32.totalorder %s23, 3
      %p36 = por %p34, %p35
      %p37 = scmp.ne.s32.totalorder %s28, %s29
      %p38 = scmp.eq.s32.totalorder %s23, 0
      %p39 = por %p37, %p38
      %p40 = scmp.ne.s32.totalorder %s28, %s29
      %p41 = scmp.eq.s32.totalorder %s24, 3
      %p42 = por %p40, %p41
      %p44 = scmp.ne.s32.totalorder %s29, %s43
      %p45 = scmp.eq.s32.totalorder %s24, 0
      %p46 = por %p44, %p45
      %s48 = sadd.s32 %s47, 1
      %p51 = scmp.eq.s32.totalorder %s18, 3
      %p52 = scmp.ne.s32.totalorder %s47, %s49
      %p53 = scmp.eq.s32.totalorder %s18, 0
      %p54 = por %p52, %p53
      %p55 = scmp.ne.s32.totalorder %s47, %s49
      %p56 = scmp.eq.s32.totalorder %s23, 3
      %p57 = por %p55, %p56
      %p58 = scmp.ne.s32.totalorder %s49, %s50
      %p59 = scmp.eq.s32.totalorder %s23, 0
      %p60 = por %p58, %p59
      %p61 = scmp.ne.s32.totalorder %s49, %s50
      %p62 = scmp.eq.s32.totalorder %s24, 3
      %p63 = por %p61, %p62
      %p65 = scmp.ne.s32.totalorder %s50, %s64
      %p66 = scmp.eq.s32.totalorder %s24, 0
      %p67 = por %p65, %p66
      %s68 = ssub.s32 %s18, %s25
      %p69 = scmp.eq.s32.totalorder %s68, 0
      %s71 = sadd.s32 %s70, 1
      %s72 = scalar_select %p69, %s70, %s71
      %p75 = pneg %p69
      %p76 = scmp.eq.s32.totalorder %s18, 3
      %p77 = por %p75, %p76
      %p78 = scmp.ne.s32.totalorder %s70, %s73
      %p79 = scmp.eq.s32.totalorder %s18, 0
      %p80 = por %p78, %p79
      %p81 = scmp.ne.s32.totalorder %s70, %s73
      %p82 = scmp.eq.s32.totalorder %s23, 3
      %p83 = por %p81, %p82
      %p84 = scmp.ne.s32.totalorder %s73, %s74
      %p85 = scmp.eq.s32.totalorder %s23, 0
      %p86 = por %p84, %p85
      %p87 = scmp.ne.s32.totalorder %s73, %s74
      %p88 = scmp.eq.s32.totalorder %s24, 3
      %p89 = por %p87, %p88
      %p91 = scmp.ne.s32.totalorder %s74, %s90
      %p92 = scmp.eq.s32.totalorder %s24, 0
      %p93 = por %p91, %p92
      %s94 = ssub.s32 %s18, %s25
      %p95 = scmp.eq.s32.totalorder %s94, 0
      %s97 = sadd.s32 %s96, 1
      %s98 = scalar_select %p95, %s96, %s97
      %p101 = pneg %p95
      %p102 = scmp.eq.s32.totalorder %s18, 3
      %p103 = por %p101, %p102
      %p104 = scmp.ne.s32.totalorder %s96, %s99
      %p105 = scmp.eq.s32.totalorder %s18, 0
      %p106 = por %p104, %p105
      %p107 = scmp.ne.s32.totalorder %s96, %s99
      %p108 = scmp.eq.s32.totalorder %s23, 3
      %p109 = por %p107, %p108
      %p110 = scmp.ne.s32.totalorder %s99, %s100
      %p111 = scmp.eq.s32.totalorder %s23, 0
      %p112 = por %p110, %p111
      %p113 = scmp.ne.s32.totalorder %s99, %s100
      %p114 = scmp.eq.s32.totalorder %s24, 3
      %p115 = por %p113, %p114
      %p117 = scmp.ne.s32.totalorder %s100, %s116
      %p118 = scmp.eq.s32.totalorder %s24, 0
      %p119 = por %p117, %p118
      %s120 = ssub.s32 %s18, %s25
      %p121 = scmp.eq.s32.totalorder %s120, 0
      %s123 = sadd.s32 %s122, 1
      %s124 = scalar_select %p121, %s122, %s123
      %p127 = pneg %p121
      %p128 = scmp.eq.s32.totalorder %s18, 3
      %p129 = por %p127, %p128
      %p130 = scmp.ne.s32.totalorder %s122, %s125
      %p131 = scmp.eq.s32.totalorder %s18, 0
      %p132 = por %p130, %p131
      %p133 = scmp.ne.s32.totalorder %s122, %s125
      %p134 = scmp.eq.s32.totalorder %s23, 3
      %p135 = por %p133, %p134
      %p136 = scmp.ne.s32.totalorder %s125, %s126
      %p137 = scmp.eq.s32.totalorder %s23, 0
      %p138 = por %p136, %p137
      %p139 = scmp.ne.s32.totalorder %s125, %s126
      %p140 = scmp.eq.s32.totalorder %s24, 3
      %p141 = por %p139, %p140
      %p143 = scmp.ne.s32.totalorder %s126, %s142
      %p144 = scmp.eq.s32.totalorder %s24, 0
      %p145 = por %p143, %p144
      %s146 = ssub.s32 %s18, %s25
      %p147 = scmp.eq.s32.totalorder %s146, 0
      %s149 = sadd.s32 %s148, 1
      %s150 = scalar_select %p147, %s148, %s149
      %p153 = pneg %p147
      %p154 = scmp.eq.s32.totalorder %s18, 3
      %p155 = por %p153, %p154
      %p156 = scmp.ne.s32.totalorder %s148, %s151
      %p157 = scmp.eq.s32.totalorder %s18, 0
      %p158 = por %p156, %p157
      %p159 = scmp.ne.s32.totalorder %s148, %s151
      %p160 = scmp.eq.s32.totalorder %s23, 3
      %p161 = por %p159, %p160
      %p162 = scmp.ne.s32.totalorder %s151, %s152
      %p163 = scmp.eq.s32.totalorder %s23, 0
      %p164 = por %p162, %p163
      %p165 = scmp.ne.s32.totalorder %s151, %s152
      %p166 = scmp.eq.s32.totalorder %s24, 3
      %p167 = por %p165, %p166
      %p169 = scmp.ne.s32.totalorder %s152, %s168
      %p170 = scmp.eq.s32.totalorder %s24, 0
      %p171 = por %p169, %p170
      %s172 = ssub.s32 %s18, %s25
      %p173 = scmp.eq.s32.totalorder %s172, 0
      %s175 = sadd.s32 %s174, 1
      %s176 = scalar_select %p173, %s174, %s175
      %p179 = pneg %p173
      %p180 = scmp.eq.s32.totalorder %s18, 3
      %p181 = por %p179, %p180
      %p182 = scmp.ne.s32.totalorder %s174, %s177
      %p183 = scmp.eq.s32.totalorder %s18, 0
      %p184 = por %p182, %p183
      %p185 = scmp.ne.s32.totalorder %s174, %s177
      %p186 = scmp.eq.s32.totalorder %s23, 3
      %p187 = por %p185, %p186
      %p188 = scmp.ne.s32.totalorder %s177, %s178
      %p189 = scmp.eq.s32.totalorder %s23, 0
      %p190 = por %p188, %p189
      %p191 = scmp.ne.s32.totalorder %s177, %s178
      %p192 = scmp.eq.s32.totalorder %s24, 3
      %p193 = por %p191, %p192
      %p195 = scmp.ne.s32.totalorder %s178, %s194
      %p196 = scmp.eq.s32.totalorder %s24, 0
      %p197 = por %p195, %p196
      %s198 = ssub.s32 %s18, %s25
      %p199 = scmp.eq.s32.totalorder %s198, 0
      %s201 = sadd.s32 %s200, 1
      %s202 = scalar_select %p199, %s200, %s201
      %p205 = pneg %p199
      %p206 = scmp.eq.s32.totalorder %s18, 3
      %p207 = por %p205, %p206
      %p208 = scmp.ne.s32.totalorder %s200, %s203
      %p209 = scmp.eq.s32.totalorder %s18, 0
      %p210 = por %p208, %p209
      %p211 = scmp.ne.s32.totalorder %s200, %s203
      %p212 = scmp.eq.s32.totalorder %s23, 3
      %p213 = por %p211, %p212
      %p214 = scmp.ne.s32.totalorder %s203, %s204
      %p215 = scmp.eq.s32.totalorder %s23, 0
      %p216 = por %p214, %p215
      %p217 = scmp.ne.s32.totalorder %s203, %s204
      %p218 = scmp.eq.s32.totalorder %s24, 3
      %p219 = por %p217, %p218
      %p221 = scmp.ne.s32.totalorder %s204, %s220
      %p222 = scmp.eq.s32.totalorder %s24, 0
      %p223 = por %p221, %p222
      %s224 = ssub.s32 %s18, %s25
      %p225 = scmp.eq.s32.totalorder %s224, 0
      %s227 = sadd.s32 %s226, 1
      %s228 = scalar_select %p225, %s226, %s227
      %p231 = pneg %p225
      %p232 = scmp.eq.s32.totalorder %s18, 3
      %p233 = por %p231, %p232
      %p234 = scmp.ne.s32.totalorder %s226, %s229
      %p235 = scmp.eq.s32.totalorder %s18, 0
      %p236 = por %p234, %p235
      %p237 = scmp.ne.s32.totalorder %s226, %s229
      %p238 = scmp.eq.s32.totalorder %s23, 3
      %p239 = por %p237, %p238
      %p240 = scmp.ne.s32.totalorder %s229, %s230
      %p241 = scmp.eq.s32.totalorder %s23, 0
      %p242 = por %p240, %p241
      %p243 = scmp.ne.s32.totalorder %s229, %s230
      %p244 = scmp.eq.s32.totalorder %s24, 3
      %p245 = por %p243, %p244
      %p247 = scmp.ne.s32.totalorder %s230, %s246
      %p248 = scmp.eq.s32.totalorder %s24, 0
      %p249 = por %p247, %p248
      %s250 = ssub.s32 %s18, %s25
      %p251 = scmp.eq.s32.totalorder %s250, 0
      %s253 = sadd.s32 %s252, 1
      %s254 = scalar_select %p251, %s252, %s253
      %p257 = pneg %p251
      %p258 = scmp.eq.s32.totalorder %s18, 3
      %p259 = por %p257, %p258
      %p260 = scmp.ne.s32.totalorder %s252, %s255
      %p261 = scmp.eq.s32.totalorder %s18, 0
      %p262 = por %p260, %p261
      %p263 = scmp.ne.s32.totalorder %s252, %s255
      %p264 = scmp.eq.s32.totalorder %s23, 3
      %p265 = por %p263, %p264
      %p266 = scmp.ne.s32.totalorder %s255, %s256
      %p267 = scmp.eq.s32.totalorder %s23, 0
      %p268 = por %p266, %p267
      %p269 = scmp.ne.s32.totalorder %s255, %s256
      %p270 = scmp.eq.s32.totalorder %s24, 3
      %p271 = por %p269, %p270
      %p273 = scmp.ne.s32.totalorder %s256, %s272
      %p274 = scmp.eq.s32.totalorder %s24, 0
      %p275 = por %p273, %p274
      %p276 = scmp.le.s32.totalorder 1, %s18
      %p277 = scmp.lt.s32.totalorder %s18, 5
      %p278 = pnand %p276, %p277
      %p279 = pneg %p278
      // Predicated region
      $region9: #{tpu_custom_call.1} parent=5 // pred_check
        _
      $region10: #{tpu_custom_call.1} parent=5 // pred_check_branch
        %281 = sbr.rel (%p278) target = $region12
      $region11: #{tpu_custom_call.1} parent=5 // pred_region
        %s282 = ssub.s32 %s18, 1
        // Predicated region
        $region13: #{tpu_custom_call.1} parent=11 // pred_check
          %p283 = pneg %p39
        $region14: #{tpu_custom_call.1} parent=11 // pred_check_branch
          %285 = sbr.rel (%p283) target = $region16
        $region15: #{tpu_custom_call.1} parent=11 // pred_region
          _
        $region16: #{tpu_custom_call.1} parent=11 // pred_fallthru
          _
        // Predicated region
        $region17: #{tpu_custom_call.1} parent=11 // pred_check
          %p286 = pneg %p60
        $region18: #{tpu_custom_call.1} parent=11 // pred_check_branch
          %288 = sbr.rel (%p286) target = $region20
        $region19: #{tpu_custom_call.1} parent=11 // pred_region
          _
        $region20: #{tpu_custom_call.1} parent=11 // pred_fallthru
          _
      $region12: #{tpu_custom_call.1} parent=5 // pred_fallthru
        _
      %p289 = scmp.lt.s32.totalorder %s18, 4
      // Predicated region
      $region21: #{tpu_custom_call.1} parent=5 // pred_check
        %p290 = pneg %p289
      $region22: #{tpu_custom_call.1} parent=5 // pred_check_branch
        %292 = sbr.rel (%p290) target = $region24
      $region23: #{tpu_custom_call.1} parent=5 // pred_region
        // Predicated region
        $region25: #{tpu_custom_call.1} parent=23 // pred_check
          %p293 = pneg %p80
        $region26: #{tpu_custom_call.1} parent=23 // pred_check_branch
          %295 = sbr.rel (%p293) target = $region28
        $region27: #{tpu_custom_call.1} parent=23 // pred_region
          %p296 = scmp.lt.s32.totalorder %s18, 3
          %s297 = scalar_select %p296, %s18, 3
          %s298 = smul.addr %s297, 8
          %s299 = scalar_lea.vmem %s2, %s298
        $region28: #{tpu_custom_call.1} parent=23 // pred_fallthru
          _
        // Predicated region
        $region29: #{tpu_custom_call.1} parent=23 // pred_check
          %p300 = pneg %p106
        $region30: #{tpu_custom_call.1} parent=23 // pred_check_branch
          %302 = sbr.rel (%p300) target = $region32
        $region31: #{tpu_custom_call.1} parent=23 // pred_region
          %p303 = scmp.lt.s32.totalorder %s18, 3
          %s304 = scalar_select %p303, %s18, 3
          %s305 = smul.addr %s304, 4
          %s306 = scalar_lea.vmem %s3, %s305
        $region32: #{tpu_custom_call.1} parent=23 // pred_fallthru
          _
        // Predicated region
        $region33: #{tpu_custom_call.1} parent=23 // pred_check
          %p307 = pneg %p132
        $region34: #{tpu_custom_call.1} parent=23 // pred_check_branch
          %309 = sbr.rel (%p307) target = $region36
        $region35: #{tpu_custom_call.1} parent=23 // pred_region
          %p310 = scmp.lt.s32.totalorder %s18, 3
          %s311 = scalar_select %p310, %s18, 3
          %s312 = scalar_lea.vmem %s4, %s311
        $region36: #{tpu_custom_call.1} parent=23 // pred_fallthru
          _
        // Predicated region
        $region37: #{tpu_custom_call.1} parent=23 // pred_check
          %p313 = pneg %p158
        $region38: #{tpu_custom_call.1} parent=23 // pred_check_branch
          %315 = sbr.rel (%p313) target = $region40
        $region39: #{tpu_custom_call.1} parent=23 // pred_region
          %p316 = scmp.lt.s32.totalorder %s18, 3
          %s317 = scalar_select %p316, %s18, 3
          %s318 = smul.addr %s317, 4
          %s319 = smul.addr %s318, 8
          %s320 = scalar_lea.vmem %s5, %s319
        $region40: #{tpu_custom_call.1} parent=23 // pred_fallthru
          _
        // Predicated region
        $region41: #{tpu_custom_call.1} parent=23 // pred_check
          %p321 = pneg %p184
        $region42: #{tpu_custom_call.1} parent=23 // pred_check_branch
          %323 = sbr.rel (%p321) target = $region44
        $region43: #{tpu_custom_call.1} parent=23 // pred_region
          %p324 = scmp.lt.s32.totalorder %s18, 3
          %s325 = scalar_select %p324, %s18, 3
          %s326 = scalar_lea.vmem %s6, %s325
        $region44: #{tpu_custom_call.1} parent=23 // pred_fallthru
          _
        // Predicated region
        $region45: #{tpu_custom_call.1} parent=23 // pred_check
          %p327 = pneg %p210
        $region46: #{tpu_custom_call.1} parent=23 // pred_check_branch
          %329 = sbr.rel (%p327) target = $region48
        $region47: #{tpu_custom_call.1} parent=23 // pred_region
          %p330 = scmp.lt.s32.totalorder %s18, 3
          %s331 = scalar_select %p330, %s18, 3
          %s332 = smul.addr %s331, 4
          %s333 = smul.addr %s332, 8
          %s334 = scalar_lea.vmem %s7, %s333
        $region48: #{tpu_custom_call.1} parent=23 // pred_fallthru
          _
        // Predicated region
        $region49: #{tpu_custom_call.1} parent=23 // pred_check
          %p335 = pneg %p236
        $region50: #{tpu_custom_call.1} parent=23 // pred_check_branch
          %337 = sbr.rel (%p335) target = $region52
        $region51: #{tpu_custom_call.1} parent=23 // pred_region
          %p338 = scmp.lt.s32.totalorder %s18, 3
          %s339 = scalar_select %p338, %s18, 3
          %s340 = scalar_lea.vmem %s8, %s339
        $region52: #{tpu_custom_call.1} parent=23 // pred_fallthru
          _
      $region24: #{tpu_custom_call.1} parent=5 // pred_fallthru
        _
      %p341 = scmp.le.s32.totalorder 1, %s18
      %p342 = scmp.lt.s32.totalorder %s18, 5
      %p343 = pnand %p341, %p342
      %p344 = pneg %p343
      // Predicated region
      $region53: #{tpu_custom_call.1} parent=5 // pred_check
        _
      $region54: #{tpu_custom_call.1} parent=5 // pred_check_branch
        %346 = sbr.rel (%p343) target = $region56
      $region55: #{tpu_custom_call.1} parent=5 // pred_region
        %s347 = ssub.s32 %s18, 1
        %p348 = pneg %p39
        %p349 = pneg %p36
        %p350 = pneg %p60
        %p351 = pneg %p57
        %p352 = scmp.lt.s32.totalorder %s23, 3
        %s353 = scalar_select %p352, %s23, 3
        %s354 = smul.addr %s353, 8
        %s355 = scalar_lea.vmem %s2, %s354
        %p356 = pneg %p86
        %p357 = pneg %p83
        %p358 = scmp.lt.s32.totalorder %s23, 3
        %s359 = scalar_select %p358, %s23, 3
        %s360 = smul.addr %s359, 4
        %s361 = scalar_lea.vmem %s3, %s360
        %p362 = pneg %p112
        %p363 = pneg %p109
        %p364 = scmp.lt.s32.totalorder %s23, 3
        %s365 = scalar_select %p364, %s23, 3
        %s366 = scalar_lea.vmem %s4, %s365
        %p367 = pneg %p138
        %p368 = pneg %p135
        %p369 = scmp.lt.s32.totalorder %s23, 3
        %s370 = scalar_select %p369, %s23, 3
        %s371 = smul.addr %s370, 4
        %s372 = smul.addr %s371, 8
        %s373 = scalar_lea.vmem %s5, %s372
        %p374 = pneg %p164
        %p375 = pneg %p161
        %p376 = scmp.lt.s32.totalorder %s23, 3
        %s377 = scalar_select %p376, %s23, 3
        %s378 = scalar_lea.vmem %s6, %s377
        %p379 = pneg %p190
        %p380 = pneg %p187
        %p381 = scmp.lt.s32.totalorder %s23, 3
        %s382 = scalar_select %p381, %s23, 3
        %s383 = smul.addr %s382, 4
        %s384 = smul.addr %s383, 8
        %s385 = scalar_lea.vmem %s7, %s384
        %p386 = pneg %p216
        %p387 = pneg %p213
        %p388 = scmp.lt.s32.totalorder %s23, 3
        %s389 = scalar_select %p388, %s23, 3
        %s390 = scalar_lea.vmem %s8, %s389
        %p391 = pneg %p242
        %p392 = pneg %p239
        %p393 = pneg %p268
        %p394 = pneg %p265
        %s395 = sand.u32 %s255, 1
        %s396 = scalar_lea.sflag [#allocation3], %s395
        %s397 = sand.u32 %s255, 1
        %s398 = smul.addr %s397, 2
        %s399 = scalar_lea.vmem [#allocation2], %s398
        %p400 = scmp.lt.s32.totalorder %s23, 3
        %s401 = scalar_select %p400, %s23, 3
        %s402 = smul.addr %s401, 8
        %s403 = scalar_lea.vmem %s2, %s402
        %p404 = scmp.lt.s32.totalorder %s23, 3
        %s405 = scalar_select %p404, %s23, 3
        %s406 = smul.addr %s405, 4
        %s407 = scalar_lea.vmem %s3, %s406
        %p408 = scmp.lt.s32.totalorder %s23, 3
        %s409 = scalar_select %p408, %s23, 3
        %s410 = scalar_lea.vmem %s4, %s409
        %p411 = scmp.lt.s32.totalorder %s23, 3
        %s412 = scalar_select %p411, %s23, 3
        %s413 = smul.addr %s412, 4
        %s414 = smul.addr %s413, 8
        %s415 = scalar_lea.vmem %s5, %s414
        %p416 = scmp.lt.s32.totalorder %s23, 3
        %s417 = scalar_select %p416, %s23, 3
        %s418 = scalar_lea.vmem %s6, %s417
        %p419 = scmp.lt.s32.totalorder %s23, 3
        %s420 = scalar_select %p419, %s23, 3
        %s421 = smul.addr %s420, 4
        %s422 = smul.addr %s421, 8
        %s423 = scalar_lea.vmem %s7, %s422
        %p424 = scmp.lt.s32.totalorder %s23, 3
        %s425 = scalar_select %p424, %s23, 3
        %s426 = scalar_lea.vmem %s8, %s425
        %v427 = vld [vmem:[%s0] sm:$0x3]
        %v428 = vld [vmem:[%s1] sm:$0x3]
        %v429 = vld [vmem:[%s403] sm:$0xff]
        %v430 = vld [vmem:[%s407] sm:$0xf]
        %vm431 = vcmask 31744
        %v433 = vsel %vm431, %v428, 0
        %vm435 = vcmask 1043456
        %v437 = vsel %vm435, %v430, 0
        %439 = vmatpush.msra.mxu0 0.0
        %440 = vmatpush.msra.mxu0 0.0
        %441 = vmatpush.msra.mxu0 0.0
        %442 = vmatpush.msra.mxu0 0.0
        %443 = vmatpush.msra.mxu0 0.0
        %444 = vmatpush.msra.mxu0 0.0
        %445 = vmatpush.msra.mxu0 0.0
        %446 = vmatpush.msra.mxu0 0.0
        %447 = vmatpush.msra.mxu0 0.0
        %448 = vmatpush.msra.mxu0 0.0
        %449 = vmatpush.msra.mxu0 0.0
        %450 = vmatpush.msra.mxu0 0.0
        %451 = vmatpush.msra.mxu0 0.0
        %452 = vmatpush.msra.mxu0 0.0
        %453 = vmatpush.msra.mxu0 0.0
        %454 = vmatpush.msra.mxu0 %v437
        %455 = vmatmul.f32.gmra.mxu0 %v433
        %v456 = vpop.f32.mrf.mxu0
        %v457 = vadd.f32 0.0, %v456
        %458 = vdwg.mxu0
        %vm459 = vcmask 64512
        %v461 = vsel %vm459, %v427, 0
        %463 = vmatpush.msra.mxu0 0.0
        %464 = vmatpush.msra.mxu0 0.0
        %465 = vmatpush.msra.mxu0 0.0
        %466 = vmatpush.msra.mxu0 0.0
        %467 = vmatpush.msra.mxu0 0.0
        %468 = vmatpush.msra.mxu0 0.0
        %469 = vmatpush.msra.mxu0 0.0
        %470 = vmatpush.msra.mxu0 0.0
        %471 = vmatpush.msra.mxu0 0.0
        %472 = vmatpush.msra.mxu0 0.0
        %473 = vmatpush.msra.mxu0 0.0
        %474 = vmatpush.msra.mxu0 0.0
        %475 = vmatpush.msra.mxu0 0.0
        %476 = vmatpush.msra.mxu0 0.0
        %477 = vmatpush.msra.mxu0 0.0
        %478 = vmatpush.msra.mxu0 %v429
        %479 = vmatmul.f32.gmra.mxu0 %v461
        %v480 = vpop.f32.mrf.mxu0
        %v481 = vadd.f32 %v457, %v480
        %482 = vdwg.mxu0
        %v483 = vld [vmem:[%s410] sm:$0x1]
        %v485 = vperm.slane %v483, 0
        %v487 = vadd.f32 %v481, %v485
        %v488 = vmax.f32 %v487, 0.0
        %v489 = vld [vmem:[%s415] sm:$0xff]
        %v490 = vld [vmem:[%s415 + $0x8] sm:$0xff]
        %v491 = vld [vmem:[%s415 + $0x10] sm:$0xff]
        %v492 = vld [vmem:[%s415 + $0x18] sm:$0x1]
        %v493 = vld [vmem:[%s418] sm:$0x1]
        %v495 = vperm.slane %v493, 0
        %vm497 = vcmask 203776
        %v499 = vsel %vm497, %v488, 0
        %vm501 = vcmask 1040384
        %v503 = vsel %vm501, %v492, 0
        %505 = vmatpush.msra.mxu0 0.0
        %506 = vmatpush.msra.mxu0 0.0
        %507 = vmatpush.msra.mxu0 0.0
        %508 = vmatpush.msra.mxu0 0.0
        %509 = vmatpush.msra.mxu0 0.0
        %510 = vmatpush.msra.mxu0 0.0
        %511 = vmatpush.msra.mxu0 0.0
        %512 = vmatpush.msra.mxu0 0.0
        %513 = vmatpush.msra.mxu0 0.0
        %514 = vmatpush.msra.mxu0 0.0
        %515 = vmatpush.msra.mxu0 0.0
        %516 = vmatpush.msra.mxu0 0.0
        %517 = vmatpush.msra.mxu0 %v503
        %518 = vmatpush.msra.mxu0 %v491
        %519 = vmatpush.msra.mxu0 %v490
        %520 = vmatpush.msra.mxu0 %v489
        %521 = vmatmul.f32.gmra.mxu0 %v499
        %v522 = vpop.f32.mrf.mxu0
        %v523 = vadd.f32 %v495, %v522
        %524 = vdwg.mxu0
        %v525 = vmax.f32 %v523, 0.0
        %v526 = vld [vmem:[%s423] sm:$0xff]
        %v527 = vld [vmem:[%s423 + $0x8] sm:$0xff]
        %v528 = vld [vmem:[%s423 + $0x10] sm:$0xff]
        %v529 = vld [vmem:[%s423 + $0x18] sm:$0x1]
        %v530 = vld [vmem:[%s426] sm:$0x1]
        %v532 = vperm.slane %v530, 0
        %v535 = vsel %vm497, %v525, 0
        %v538 = vsel %vm501, %v529, 0
        %540 = vmatpush.msra.mxu0 0.0
        %541 = vmatpush.msra.mxu0 0.0
        %542 = vmatpush.msra.mxu0 0.0
        %543 = vmatpush.msra.mxu0 0.0
        %544 = vmatpush.msra.mxu0 0.0
        %545 = vmatpush.msra.mxu0 0.0
        %546 = vmatpush.msra.mxu0 0.0
        %547 = vmatpush.msra.mxu0 0.0
        %548 = vmatpush.msra.mxu0 0.0
        %549 = vmatpush.msra.mxu0 0.0
        %550 = vmatpush.msra.mxu0 0.0
        %551 = vmatpush.msra.mxu0 0.0
        %552 = vmatpush.msra.mxu0 %v538
        %553 = vmatpush.msra.mxu0 %v528
        %554 = vmatpush.msra.mxu0 %v527
        %555 = vmatpush.msra.mxu0 %v526
        %556 = vmatmul.f32.gmra.mxu0 %v535
        %v557 = vpop.f32.mrf.mxu0
        %v558 = vadd.f32 %v532, %v557
        %559 = vdwg.mxu0
        %560 = vst [vmem:[%s399] sm:$0x3] %v558
        %s561 = sand.u32 %s255, 1
        %s562 = scalar_lea.sflag [#allocation3], %s561
        %s563 = sand.u32 %s255, 1
        %s564 = smul.addr %s563, 2
        %s565 = scalar_lea.vmem [#allocation2], %s564
        // Predicated region
        $region57: #{tpu_custom_call.1} parent=55 // pred_check
          %p566 = pneg %p265
        $region58: #{tpu_custom_call.1} parent=55 // pred_check_branch
          %568 = sbr.rel (%p566) target = $region60
        $region59: #{tpu_custom_call.1} parent=55 // pred_region
          %570 = vsyncadd %s562, 0
          %s571 = smul.addr %s23, 2
          %s572 = scalar_lea.hbm %s9, %s571
          %s574 = sshll.u32 %s565, 4
          %s575 = int_to_ptr.vmem [resolvable:$true] %s574
          %s576 = sshll.u32 %s572, 4
          %s577 = int_to_ptr.hbm [resolvable:$true] %s576
          %579 = dma.vmem_to_hbm [thread:$0]  %s575, 32, %s577, %s562
        $region60: #{tpu_custom_call.1} parent=55 // pred_fallthru
          _
      $region56: #{tpu_custom_call.1} parent=5 // pred_fallthru
        _
      %p580 = scmp.le.s32.totalorder 2, %s18
      // Predicated region
      $region61: #{tpu_custom_call.1} parent=5 // pred_check
        %p581 = pneg %p580
      $region62: #{tpu_custom_call.1} parent=5 // pred_check_branch
        %583 = sbr.rel (%p581) target = $region64
      $region63: #{tpu_custom_call.1} parent=5 // pred_region
        %s584 = ssub.s32 %s18, 2
        // Predicated region
        $region65: #{tpu_custom_call.1} parent=63 // pred_check
          %p585 = pneg %p271
        $region66: #{tpu_custom_call.1} parent=63 // pred_check_branch
          %587 = sbr.rel (%p585) target = $region68
        $region67: #{tpu_custom_call.1} parent=63 // pred_region
          %s588 = sand.u32 %s256, 1
          %s589 = scalar_lea.sflag [#allocation3], %s588
          %s590 = sand.u32 %s256, 1
          %s591 = smul.addr %s590, 2
          %s592 = scalar_lea.vmem [#allocation2], %s591
          %594 = dma.done %s589, 32
        $region68: #{tpu_custom_call.1} parent=63 // pred_fallthru
          _
      $region64: #{tpu_custom_call.1} parent=5 // pred_fallthru
        _
    $region6: #{tpu_custom_call.1} parent=1 // loop_footer
      %s22 = sadd.s32 1, %s18
    $region7: #{tpu_custom_call.1} parent=1 // loop_footer_branch
      %17 = sbr.rel target = $region3
    $region8: #{tpu_custom_call.1} parent=1 // loop_exit
      _
    %595 = vsyncpa [#allocation3], 1
    %s596 = scalar_lea.sflag [#allocation3], 1
    %597 = vsyncpa %s596, 1

</llo_original>
